<compile_context>
chip_gen: v7x
topology: tpu7x:2x2x1
jax: 0.10.0
libtpu: 0.0.40
codegen_flags: <defaults>
</compile_context>

<pallas_src>
import jax
import jax.numpy as jnp
from jax.experimental import pallas as pl
from jax.experimental.pallas import tpu as pltpu


def _round_up(n, m):
    return ((n + m - 1) // m) * m


def dual_variable_kernel(x_ref, w1_ref, b1_ref, w2_ref, b2_ref, o_ref):
    """One (TB, Din) batch tile -> (TB, Dout). Weights are VMEM-resident."""
    din = x_ref.shape[1]
    dout = o_ref.shape[1]

    x = x_ref[...].astype(jnp.float32)
    b1 = b1_ref[...].astype(jnp.float32)             # (1, Hp) broadcasts over batch

    if din <= 8:
        # fc1 on the VPU: a K=din matmul is pure MXU push/drain latency, so use
        # broadcast multiply-adds instead (unrolled at trace time).
        h = b1
        for d in range(din):
            h = h + x[:, d:d + 1] * w1_ref[d:d + 1, :].astype(jnp.float32)
    else:
        h = jnp.dot(x, w1_ref[...].astype(jnp.float32),
                    preferred_element_type=jnp.float32) + b1

    h = jnp.maximum(h, 0.0)                           # ReLU, f32 elementwise on VPU

    # fc2 on the MXU (128x128 tile), f32 accumulation.
    out = jnp.dot(h.astype(w2_ref.dtype), w2_ref[...],
                  preferred_element_type=jnp.float32)
    # Keep only the logical output columns; add the (unpadded) bias and store.
    # The (TB, Dout) store is lane-masked but tiny (Dout=2) -> minimal HBM bytes.
    out = out[:, :dout] + b2_ref[...].astype(jnp.float32)
    o_ref[...] = out.astype(o_ref.dtype)


def prepare_params(w1, b1, w2, b2):
    """One-time padding of weights to MXU-friendly shapes (done outside the
    per-call wrapper so the forward path contains no XLA pad kernels)."""
    Din, H = w1.shape
    Dout = w2.shape[1]
    Hp = _round_up(max(H, 128), 128)
    Dp = _round_up(max(Dout, 128), 128)
    # Zero padding is exact: ReLU(0)=0 and padded w2 rows/cols are zero.
    w1p = jnp.zeros((Din, Hp), w1.dtype).at[:, :H].set(w1)
    b1p = jnp.zeros((1, Hp), b1.dtype).at[:, :H].set(b1.reshape(1, H))
    w2p = jnp.zeros((Hp, Dp), w2.dtype).at[:H, :Dout].set(w2)
    b2r = b2.reshape(1, Dout)
    return (w1p, b1p, w2p, b2r, Dout)


def dual_variable_forward(x, params, *, block_b=2048):
    """x: (B, Din); params from prepare_params(). Returns (B, Dout)."""
    w1p, b1p, w2p, b2, Dout = params
    B, Din = x.shape
    Hp = w1p.shape[1]
    Dp = w2p.shape[1]

    # Batch tile: multiple of 8 (sublane constraint), no batch padding of x.
    TB = min(block_b, _round_up(B, 8))
    if B > 8:
        # Ensure at least 2 grid steps so the "parallel" axis can shard across
        # both TensorCores on v7x (no effect on v5e/v6e beyond smaller tiles).
        TB = min(TB, _round_up(pl.cdiv(B, 2), 8))
    TB = max(TB, 8)
    grid_b = pl.cdiv(B, TB)

    out = pl.pallas_call(
        dual_variable_kernel,
        out_shape=jax.ShapeDtypeStruct((B, Dout), x.dtype),
        grid=(grid_b,),
        in_specs=[
            pl.BlockSpec((TB, Din), lambda i: (i, 0)),   # batch tile of x
            pl.BlockSpec((Din, Hp), lambda i: (0, 0)),   # weights stay resident
            pl.BlockSpec((1, Hp), lambda i: (0, 0)),
            pl.BlockSpec((Hp, Dp), lambda i: (0, 0)),
            pl.BlockSpec((1, Dout), lambda i: (0, 0)),   # bias2 unpadded
        ],
        out_specs=pl.BlockSpec((TB, Dout), lambda i: (i, 0)),   # narrow output
        compiler_params=pltpu.CompilerParams(
            dimension_semantics=("parallel",)),          # megacore sharding on v7x
    )(x, w1p, b1p, w2p, b2)

    return out


def init_params(key, input_dim=2, hidden_dim=100, output_dim=2, dtype=jnp.float32):
    """Deterministic init mimicking PyTorch nn.Linear default U(-1/sqrt(fan_in), .)."""
    k1, k2, k3, k4 = jax.random.split(key, 4)
    bound1 = 1.0 / jnp.sqrt(jnp.float32(input_dim))
    bound2 = 1.0 / jnp.sqrt(jnp.float32(hidden_dim))
    w1 = jax.random.uniform(k1, (input_dim, hidden_dim), dtype, -bound1, bound1)
    b1 = jax.random.uniform(k2, (1, hidden_dim), dtype, -bound1, bound1)
    w2 = jax.random.uniform(k3, (hidden_dim, output_dim), dtype, -bound2, bound2)
    b2 = jax.random.uniform(k4, (1, output_dim), dtype, -bound2, bound2)
    return w1, b1, w2, b2


if __name__ == "__main__":
    key = jax.random.PRNGKey(0)
    k_x, k_x2, k_p = jax.random.split(key, 3)

    input_dim, hidden_dim, output_dim = 2, 100, 2
    w1, b1, w2, b2 = init_params(k_p, input_dim, hidden_dim, output_dim)
    params = prepare_params(w1, b1, w2, b2)

    def ref_fwd(x):
        return jnp.maximum(x @ w1 + b1, 0.0) @ w2 + b2

    # Small single-tile case.
    batch = 8
    x = jax.random.normal(k_x, (batch, input_dim), jnp.float32)
    out = jax.block_until_ready(dual_variable_forward(x, params))
    assert out.shape == (batch, output_dim)
    assert jnp.allclose(out, ref_fwd(x), atol=1e-5, rtol=1e-5), \
        f"max abs err = {jnp.max(jnp.abs(out - ref_fwd(x)))}"

    # Multi-step grid with a ragged (partial) last block, exercising the
    # masked-store path and the >=2-step TC sharding heuristic.
    batch2 = 200
    x2 = jax.random.normal(k_x2, (batch2, input_dim), jnp.float32)
    out2 = jax.block_until_ready(dual_variable_forward(x2, params))
    assert out2.shape == (batch2, output_dim)
    assert jnp.allclose(out2, ref_fwd(x2), atol=1e-5, rtol=1e-5), \
        f"max abs err = {jnp.max(jnp.abs(out2 - ref_fwd(x2)))}"

    # TODO(synk): enforce_lipschitz / spectral_normalisation / weight_clipping are
    # training-time weight updates, not part of the forward pass; not implemented here.
    print("KERNEL_OK")
</pallas_src>

<mosaic_0001>
module attributes {stable_mosaic.version = 11 : i64} {
  func.func @dual_variable_kernel(%arg0: i32, %arg1: memref<8x2xf32, #tpu.memory_space<vmem>>, %arg2: memref<2x128xf32, #tpu.memory_space<vmem>>, %arg3: memref<1x128xf32, #tpu.memory_space<vmem>>, %arg4: memref<128x128xf32, #tpu.memory_space<vmem>>, %arg5: memref<1x2xf32, #tpu.memory_space<vmem>>, %arg6: memref<8x2xf32, #tpu.memory_space<vmem>>) attributes {dimension_semantics = [#tpu.dimension_semantics<parallel>], iteration_bounds = array<i64: 1>, scalar_prefetch = 0 : i64, scratch_operands = 0 : i64, tpu.core_type = #tpu.core_type<tc>, window_params = [{transform_indices = @transform_0, window_bounds = array<i64: 8, 2>}, {pipeline_mode = #tpu.pipeline_mode<synchronous>, transform_indices = @transform_1, window_bounds = array<i64: 2, 128>}, {pipeline_mode = #tpu.pipeline_mode<synchronous>, transform_indices = @transform_2, window_bounds = array<i64: 1, 128>}, {pipeline_mode = #tpu.pipeline_mode<synchronous>, transform_indices = @transform_3, window_bounds = array<i64: 128, 128>}, {pipeline_mode = #tpu.pipeline_mode<synchronous>, transform_indices = @transform_4, window_bounds = array<i64: 1, 2>}, {transform_indices = @transform_5, window_bounds = array<i64: 8, 2>}]} {
    %c0 = arith.constant 0 : index
    %c0_0 = arith.constant 0 : index
    %0 = vector.load %arg1[%c0, %c0_0] : memref<8x2xf32, #tpu.memory_space<vmem>>, vector<8x2xf32>
    %c0_1 = arith.constant 0 : index
    %c0_2 = arith.constant 0 : index
    %1 = vector.load %arg3[%c0_1, %c0_2] : memref<1x128xf32, #tpu.memory_space<vmem>>, vector<1x128xf32>
    %2 = vector.extract_strided_slice %0 {offsets = [0, 0], sizes = [8, 1], strides = [1, 1]} : vector<8x2xf32> to vector<8x1xf32>
    %c0_3 = arith.constant 0 : index
    %c0_4 = arith.constant 0 : index
    %3 = vector.load %arg2[%c0_3, %c0_4] : memref<2x128xf32, #tpu.memory_space<vmem>>, vector<1x128xf32>
    %4 = vector.broadcast %2 : vector<8x1xf32> to vector<8x128xf32>
    %5 = vector.broadcast %3 : vector<1x128xf32> to vector<8x128xf32>
    %6 = arith.mulf %4, %5 : vector<8x128xf32>
    %7 = vector.broadcast %1 : vector<1x128xf32> to vector<8x128xf32>
    %8 = arith.addf %7, %6 : vector<8x128xf32>
    %9 = vector.extract_strided_slice %0 {offsets = [0, 1], sizes = [8, 1], strides = [1, 1]} : vector<8x2xf32> to vector<8x1xf32>
    %c1 = arith.constant 1 : index
    %c0_5 = arith.constant 0 : index
    %10 = vector.load %arg2[%c1, %c0_5] : memref<2x128xf32, #tpu.memory_space<vmem>>, vector<1x128xf32>
    %11 = vector.broadcast %9 : vector<8x1xf32> to vector<8x128xf32>
    %12 = vector.broadcast %10 : vector<1x128xf32> to vector<8x128xf32>
    %13 = arith.mulf %11, %12 : vector<8x128xf32>
    %14 = arith.addf %8, %13 : vector<8x128xf32>
    %cst = arith.constant 0.000000e+00 : f32
    %15 = vector.broadcast %cst : f32 to vector<8x128xf32>
    %16 = arith.maximumf %14, %15 : vector<8x128xf32>
    %c0_6 = arith.constant 0 : index
    %c0_7 = arith.constant 0 : index
    %17 = vector.load %arg4[%c0_6, %c0_7] : memref<128x128xf32, #tpu.memory_space<vmem>>, vector<128x128xf32>
    %cst_8 = arith.constant dense<0.000000e+00> : vector<8x128xf32>
    %18 = tpu.matmul %16, %17, %cst_8 {dimension_numbers = #tpu.dot_dimension_numbers<[1], [0], [0], [1], [0, 0, 1, 1], [], []>} : vector<8x128xf32>, vector<128x128xf32>, vector<8x128xf32> -> vector<8x128xf32>
    %19 = vector.extract_strided_slice %18 {offsets = [0, 0], sizes = [8, 2], strides = [1, 1]} : vector<8x128xf32> to vector<8x2xf32>
    %c0_9 = arith.constant 0 : index
    %c0_10 = arith.constant 0 : index
    %20 = vector.load %arg5[%c0_9, %c0_10] : memref<1x2xf32, #tpu.memory_space<vmem>>, vector<1x2xf32>
    %21 = vector.broadcast %20 : vector<1x2xf32> to vector<8x2xf32>
    %22 = arith.addf %19, %21 : vector<8x2xf32>
    %c0_11 = arith.constant 0 : index
    %c0_12 = arith.constant 0 : index
    %23 = vector.load %arg6[%c0_11, %c0_12] : memref<8x2xf32, #tpu.memory_space<vmem>>, vector<8x2xf32>
    tpu.vector_store %arg6[%c0_11, %c0_12], %22 {strides = array<i32>} : memref<8x2xf32, #tpu.memory_space<vmem>>, vector<8x2xf32>,
    return
  }
  func.func @transform_0(%arg0: i32) -> (i32, i32) {
    %c0_i32 = arith.constant 0 : i32
    %c0_i32_0 = arith.constant 0 : i32
    return %arg0, %c0_i32 : i32, i32
  }
  func.func @transform_1(%arg0: i32) -> (i32, i32) {
    %c0_i32 = arith.constant 0 : i32
    %c0_i32_0 = arith.constant 0 : i32
    %c0_i32_1 = arith.constant 0 : i32
    return %c0_i32, %c0_i32_0 : i32, i32
  }
  func.func @transform_2(%arg0: i32) -> (i32, i32) {
    %c0_i32 = arith.constant 0 : i32
    %c0_i32_0 = arith.constant 0 : i32
    %c0_i32_1 = arith.constant 0 : i32
    return %c0_i32, %c0_i32_0 : i32, i32
  }
  func.func @transform_3(%arg0: i32) -> (i32, i32) {
    %c0_i32 = arith.constant 0 : i32
    %c0_i32_0 = arith.constant 0 : i32
    %c0_i32_1 = arith.constant 0 : i32
    return %c0_i32, %c0_i32_0 : i32, i32
  }
  func.func @transform_4(%arg0: i32) -> (i32, i32) {
    %c0_i32 = arith.constant 0 : i32
    %c0_i32_0 = arith.constant 0 : i32
    %c0_i32_1 = arith.constant 0 : i32
    return %c0_i32, %c0_i32_0 : i32, i32
  }
  func.func @transform_5(%arg0: i32) -> (i32, i32) {
    %c0_i32 = arith.constant 0 : i32
    %c0_i32_0 = arith.constant 0 : i32
    return %arg0, %c0_i32 : i32, i32
  }
}

</mosaic_0001>

<llo_original>
// kernel: tpu_custom_call.1
$region0: #{tpu_custom_call.1}
  #allocation0 [shape = 'u32[]', space=smem, size = 0x4, offset = 0x4, fixed_abs, tag = 'smem constant byte address 0x4 - core index']
  #allocation1 [shape = 'u32[144,128]{1,0:T(1,128)}', space=vmem, size = 0x12000, scoped, tag = 'internal scratch']
  %s0 = inlined_call_operand.vmem [shape: f32[8,2], index: 0, kind: input, shape index: {}]
  %s1 = inlined_call_operand.vmem [shape: f32[2,128], index: 1, kind: input, shape index: {}]
  %s2 = inlined_call_operand.vmem [shape: f32[1,128], index: 2, kind: input, shape index: {}]
  %s3 = inlined_call_operand.hbm [shape: f32[128,128], index: 3, kind: input, shape index: {}]
  %s4 = inlined_call_operand.vmem [shape: f32[1,2], index: 4, kind: input, shape index: {}]
  %s5 = inlined_call_operand.vmem [shape: f32[8,2], index: 5, kind: output, shape index: {}]
  %s6 = sld [smem:[#allocation0]]
  $region34: #{tpu_custom_call.1} parent=0
    _
  %s8 = ssub.s32 1, %s6
  %s9 = scalar_select 0, %s8, %s6
  $region1: #{tpu_custom_call.1} parent=0
    #allocation2 [shape = 'u8[65536]{0}', space=vmem, size = 0x10000, scoped, tag = 'input window, operand 3, single buffered']
    #allocation3 [shape = 's32[1]{0}', space=sflag, size = 0x4, scoped, tag = 'scoped memory for tpu_custom_call.1']
    %10 = vsyncpa [#allocation3], 0
    // Predicated region
    $region2: #{tpu_custom_call.1} parent=1 // pred_check
      _
    $region3: #{tpu_custom_call.1} parent=1 // pred_check_branch
      %12 = sbr.rel (0) target = $region5
    $region4: #{tpu_custom_call.1} parent=1 // pred_region
      _
    $region5: #{tpu_custom_call.1} parent=1 // pred_fallthru
      _
    // Predicated region
    $region6: #{tpu_custom_call.1} parent=1 // pred_check
      _
    $region7: #{tpu_custom_call.1} parent=1 // pred_check_branch
      %14 = sbr.rel (0) target = $region9
    $region8: #{tpu_custom_call.1} parent=1 // pred_region
      _
    $region9: #{tpu_custom_call.1} parent=1 // pred_fallthru
      _
    // Predicated region
    $region10: #{tpu_custom_call.1} parent=1 // pred_check
      _
    $region11: #{tpu_custom_call.1} parent=1 // pred_check_branch
      %16 = sbr.rel (0) target = $region13
    $region12: #{tpu_custom_call.1} parent=1 // pred_region
      _
    $region13: #{tpu_custom_call.1} parent=1 // pred_fallthru
      _
    // Predicated region
    $region14: #{tpu_custom_call.1} parent=1 // pred_check
      _
    $region15: #{tpu_custom_call.1} parent=1 // pred_check_branch
      %18 = sbr.rel (0) target = $region17
    $region16: #{tpu_custom_call.1} parent=1 // pred_region
      %s20 = ssub.s32 2048, 2048
      %21 = vsyncadd [#allocation3], %s20
      %s22 = sshll.u32 [#allocation2], 4
      %s23 = int_to_ptr.vmem [resolvable:$true] %s22
      %28 = dma.hbm_to_vmem [thread:$0]  %s3, 2048, %s23, [#allocation3], 128, 128, 8
    $region17: #{tpu_custom_call.1} parent=1 // pred_fallthru
      _
    // Predicated region
    $region18: #{tpu_custom_call.1} parent=1 // pred_check
      _
    $region19: #{tpu_custom_call.1} parent=1 // pred_check_branch
      %30 = sbr.rel (0) target = $region21
    $region20: #{tpu_custom_call.1} parent=1 // pred_region
      _
    $region21: #{tpu_custom_call.1} parent=1 // pred_fallthru
      _
    // Predicated region
    $region22: #{tpu_custom_call.1} parent=1 // pred_check
      _
    $region23: #{tpu_custom_call.1} parent=1 // pred_check_branch
      %32 = sbr.rel (0) target = $region25
    $region24: #{tpu_custom_call.1} parent=1 // pred_region
      %33 = dma.done [#allocation3], 2048
    $region25: #{tpu_custom_call.1} parent=1 // pred_fallthru
      _
    %v34 = vld [vmem:[%s0] sm:$0xff]
    %v35 = vld [vmem:[%s2] sm:$0x1]
    %v36 = vld [vmem:[%s1] sm:$0x1]
    %38 = vset.pattern.permute.xlu0 0
    %39 = vperm.xlu0 %38, %v34
    %v40 = vpop.permute.xlu0 %39
    %v42 = vlaneseq
    %v43 = vshrl.u32 %v42, 7
    %v44 = vsub.s32 0, %v43
    %v45 = vrot.slane %v36, %v44
    %v46 = vmul.f32 %v40, %v45
    %v48 = vlaneseq
    %v49 = vshrl.u32 %v48, 7
    %v50 = vsub.s32 0, %v49
    %v51 = vrot.slane %v35, %v50
    %v53 = vadd.f32 %v51, %v46
    %v54 = vld [vmem:[%s1 + $0x1] sm:$0x1]
    %55 = vset.pattern.permute.xlu0 1
    %56 = vperm.xlu0 %55, %v34
    %v57 = vpop.permute.xlu0 %56
    %v59 = vlaneseq
    %v60 = vshrl.u32 %v59, 7
    %v61 = vsub.s32 0, %v60
    %v62 = vrot.slane %v54, %v61
    %v63 = vmul.f32 %v57, %v62
    %v64 = vadd.f32 %v53, %v63
    %v65 = vmax.f32 %v64, 0.0
    %v66 = vld [vmem:[#allocation2] sm:$0xff]
    %v67 = vld [vmem:[#allocation2 + $0x8] sm:$0xff]
    %v68 = vld [vmem:[#allocation2 + $0x10] sm:$0xff]
    %v69 = vld [vmem:[#allocation2 + $0x18] sm:$0xff]
    %v70 = vld [vmem:[#allocation2 + $0x20] sm:$0xff]
    %v71 = vld [vmem:[#allocation2 + $0x28] sm:$0xff]
    %v72 = vld [vmem:[#allocation2 + $0x30] sm:$0xff]
    %v73 = vld [vmem:[#allocation2 + $0x38] sm:$0xff]
    %v74 = vld [vmem:[#allocation2 + $0x40] sm:$0xff]
    %v75 = vld [vmem:[#allocation2 + $0x48] sm:$0xff]
    %v76 = vld [vmem:[#allocation2 + $0x50] sm:$0xff]
    %v77 = vld [vmem:[#allocation2 + $0x58] sm:$0xff]
    %v78 = vld [vmem:[#allocation2 + $0x60] sm:$0xff]
    %v79 = vld [vmem:[#allocation2 + $0x68] sm:$0xff]
    %v80 = vld [vmem:[#allocation2 + $0x70] sm:$0xff]
    %v81 = vld [vmem:[#allocation2 + $0x78] sm:$0xff]
    %82 = vmatprep.subr.mxu0 0.0
    %83 = vmatpush1.msra.mxu0 %v66
    %84 = vmatprep.subr.mxu0 0.0
    %85 = vmatpush1.msra.mxu0 %v67
    %86 = vmatprep.subr.mxu0 0.0
    %87 = vmatpush1.msra.mxu0 %v68
    %88 = vmatprep.subr.mxu0 0.0
    %89 = vmatpush1.msra.mxu0 %v69
    %90 = vmatprep.subr.mxu0 0.0
    %91 = vmatpush1.msra.mxu0 %v70
    %92 = vmatprep.subr.mxu0 0.0
    %93 = vmatpush1.msra.mxu0 %v71
    %94 = vmatprep.subr.mxu0 0.0
    %95 = vmatpush1.msra.mxu0 %v72
    %96 = vmatprep.subr.mxu0 0.0
    %97 = vmatpush1.msra.mxu0 %v73
    %98 = vmatprep.subr.mxu0 0.0
    %99 = vmatpush1.msra.mxu0 %v74
    %100 = vmatprep.subr.mxu0 0.0
    %101 = vmatpush1.msra.mxu0 %v75
    %102 = vmatprep.subr.mxu0 0.0
    %103 = vmatpush1.msra.mxu0 %v76
    %104 = vmatprep.subr.mxu0 0.0
    %105 = vmatpush1.msra.mxu0 %v77
    %106 = vmatprep.subr.mxu0 0.0
    %107 = vmatpush1.msra.mxu0 %v78
    %108 = vmatprep.subr.mxu0 0.0
    %109 = vmatpush1.msra.mxu0 %v79
    %110 = vmatprep.subr.mxu0 0.0
    %111 = vmatpush1.msra.mxu0 %v80
    %112 = vmatprep.subr.mxu0 0.0
    %113 = vmatpush1.msra.mxu0 %v81
    %114 = vmatprep.subr.mxu0 0.0
    %115 = vmatpush1.msra.mxu0 0.0
    %116 = vmatprep.subr.mxu0 0.0
    %117 = vmatpush1.msra.mxu0 0.0
    %118 = vmatprep.subr.mxu0 0.0
    %119 = vmatpush1.msra.mxu0 0.0
    %120 = vmatprep.subr.mxu0 0.0
    %121 = vmatpush1.msra.mxu0 0.0
    %122 = vmatprep.subr.mxu0 0.0
    %123 = vmatpush1.msra.mxu0 0.0
    %124 = vmatprep.subr.mxu0 0.0
    %125 = vmatpush1.msra.mxu0 0.0
    %126 = vmatprep.subr.mxu0 0.0
    %127 = vmatpush1.msra.mxu0 0.0
    %128 = vmatprep.subr.mxu0 0.0
    %129 = vmatpush1.msra.mxu0 0.0
    %130 = vmatprep.subr.mxu0 0.0
    %131 = vmatpush1.msra.mxu0 0.0
    %132 = vmatprep.subr.mxu0 0.0
    %133 = vmatpush1.msra.mxu0 0.0
    %134 = vmatprep.subr.mxu0 0.0
    %135 = vmatpush1.msra.mxu0 0.0
    %136 = vmatprep.subr.mxu0 0.0
    %137 = vmatpush1.msra.mxu0 0.0
    %138 = vmatprep.subr.mxu0 0.0
    %139 = vmatpush1.msra.mxu0 0.0
    %140 = vmatprep.subr.mxu0 0.0
    %141 = vmatpush1.msra.mxu0 0.0
    %142 = vmatprep.subr.mxu0 0.0
    %143 = vmatpush1.msra.mxu0 0.0
    %144 = vmatprep.subr.mxu0 0.0
    %145 = vmatpush1.msra.mxu0 0.0
    %146 = vmatprep.mubr.f32.mxu0 0.0
    %147 = vmatmul.mubr.f32.gmra.mrb[0].mxu0 %v65
    %v148 = vpop.f32.mrb[0].mxu0
    %v149 = vadd.f32 0.0, %v148
    %v150 = vpop.f32.mrb[0].mxu0
    %151 = vdwg.mxu0
    %v152 = vld [vmem:[%s4] sm:$0x1]
    %v154 = vlaneseq
    %v155 = vshrl.u32 %v154, 7
    %v156 = vsub.s32 0, %v155
    %v157 = vrot.slane %v152, %v156
    %v159 = vadd.f32 %v149, %v157
    %vm160 = vcmask 15360
    %161 = vst.msk [vmem:[%s5] sm:$0xff] %vm160, %v159
    // Predicated region
    $region26: #{tpu_custom_call.1} parent=1 // pred_check
      _
    $region27: #{tpu_custom_call.1} parent=1 // pred_check_branch
      %163 = sbr.rel (0) target = $region29
    $region28: #{tpu_custom_call.1} parent=1 // pred_region
      _
    $region29: #{tpu_custom_call.1} parent=1 // pred_fallthru
      _
    // Predicated region
    $region30: #{tpu_custom_call.1} parent=1 // pred_check
      _
    $region31: #{tpu_custom_call.1} parent=1 // pred_check_branch
      %165 = sbr.rel (0) target = $region33
    $region32: #{tpu_custom_call.1} parent=1 // pred_region
      _
    $region33: #{tpu_custom_call.1} parent=1 // pred_fallthru
      _
    %166 = vsyncpa [#allocation3], 1

</llo_original>
